<compile_context>
chip_gen: v7x
topology: tpu7x:2x2x1
jax: 0.10.0
libtpu: 0.0.40
codegen_flags: <defaults>
</compile_context>

<pallas_src>
import functools
import math

import jax
import jax.numpy as jnp
from jax.experimental import pallas as pl
from jax.experimental.pallas import tpu as pltpu


# ----------------------------------------------------------------------------
# Kernels
# ----------------------------------------------------------------------------
def _eca_kernel_pair(last_ref, next_ref, a_ref, out_ref):
    """last/next/out blocks: (Bt, C, HW); a_ref: (C, C) banded conv matrix.

    The 1/HW of the global average pool is already folded into a_ref, so the
    per-(b, c) gate is sigmoid(sum_HW(last) @ A).
    """
    s = jnp.sum(last_ref[...].astype(jnp.float32), axis=2)            # (Bt, C)
    gate = jax.nn.sigmoid(
        jnp.dot(s, a_ref[...], preferred_element_type=jnp.float32))   # (Bt, C)
    out_ref[...] = (next_ref[...] * gate[:, :, None]).astype(out_ref.dtype)


def _eca_kernel_shared(x_ref, a_ref, out_ref):
    """Single-stream variant for the classic ECA case nextlayer == lastlayer."""
    x = x_ref[...]
    s = jnp.sum(x.astype(jnp.float32), axis=2)                         # (Bt, C)
    gate = jax.nn.sigmoid(
        jnp.dot(s, a_ref[...], preferred_element_type=jnp.float32))    # (Bt, C)
    out_ref[...] = (x * gate[:, :, None]).astype(out_ref.dtype)


# ----------------------------------------------------------------------------
# Tiling / VMEM helpers
# ----------------------------------------------------------------------------
def _vmem_budget_bytes():
    """Generation-aware VMEM cap: ~75% of physical capacity (floor 16 MiB)."""
    cap = 64 << 20  # conservative fallback (v7x-sized)
    try:
        cap = int(getattr(pltpu.get_tpu_info(), "vmem_capacity_bytes", cap))
    except Exception:
        pass
    return max(16 << 20, (cap * 3) // 4)


def _pick_batch_tile(B, sample_bytes, n_streams, resident_bytes, vmem_budget,
                     target_block_bytes=8 << 20, min_block_bytes=1 << 20):
    """Batch rows per grid step for this bandwidth-bound streaming kernel."""
    # Each streamed input and the output are double-buffered by the pipeline.
    per_sample_vmem = 2 * (n_streams + 1) * sample_bytes
    fit_vmem = max(1, (vmem_budget - resident_bytes) // max(per_sample_vmem, 1))
    fit_target = max(1, target_block_bytes // max(sample_bytes, 1))
    bt = int(min(B, fit_target, fit_vmem))
    # Prefer >= 8 grid steps (>= 4 per v7x TensorCore) as long as blocks stay
    # >= ~1 MiB; always keep >= 2 steps so the DMA pipeline and the "parallel"
    # megacore sharding have something to overlap.
    for min_steps, keep_min_block in ((8, True), (2, False)):
        cand = pl.cdiv(B, min_steps)
        if cand < bt and (not keep_min_block
                          or cand * sample_bytes >= min_block_bytes):
            bt = cand
    return max(1, int(bt))


# ----------------------------------------------------------------------------
# Wrapper
# ----------------------------------------------------------------------------
def attention_layer_pallas(lastlayer, nextlayer, conv_weight, *,
                           shared_input=False):
    """lastlayer, nextlayer: (B, C, H, W); conv_weight: (3,) (Conv1d(1,1,3) taps).

    If shared_input=True (or nextlayer is literally the same array object as
    lastlayer), only lastlayer is streamed and used for both the pool and the
    gated multiply (the standard ECA pattern).
    """
    B, C, H, W = lastlayer.shape
    HW = H * W
    shared = shared_input or (nextlayer is None) or (nextlayer is lastlayer)

    # Free reshapes (contiguous); no padding, no extra HBM copies.
    last_f = lastlayer.reshape(B, C, HW)
    next_f = None if shared else nextlayer.reshape(B, C, HW)

    # k=3 "same"-padded channel conv as a banded (C, C) matrix, with the 1/HW of
    # the global average pool folded into the taps:
    #   y[c] = (w0*s[c-1] + w1*s[c] + w2*s[c+1]) / HW,  s = spatial sum.
    w = conv_weight.reshape(-1).astype(jnp.float32) * (1.0 / float(HW))
    rows = jnp.arange(C)[:, None]
    cols = jnp.arange(C)[None, :]
    a_mat = (jnp.where(rows == cols - 1, w[0], 0.0)
             + jnp.where(rows == cols, w[1], 0.0)
             + jnp.where(rows == cols + 1, w[2], 0.0)).astype(jnp.float32)

    sample_bytes = C * HW * jnp.dtype(lastlayer.dtype).itemsize
    n_streams = 1 if shared else 2
    vmem_budget = _vmem_budget_bytes()
    bt = _pick_batch_tile(B, sample_bytes, n_streams, C * C * 4, vmem_budget)
    grid = (pl.cdiv(B, bt),)  # boundary block (if any) is masked by Pallas

    # (bt, C, HW): C and HW equal the full array dims -> exempt from (8,128).
    blk = pl.BlockSpec((bt, C, HW), lambda b: (b, 0, 0))
    a_spec = pl.BlockSpec((C, C), lambda b: (0, 0))  # resident conv matrix

    if shared:
        kernel = _eca_kernel_shared
        in_specs = [blk, a_spec]
        operands = (last_f, a_mat)
    else:
        kernel = _eca_kernel_pair
        in_specs = [blk, blk, a_spec]
        operands = (last_f, next_f, a_mat)

    out = pl.pallas_call(
        kernel,
        out_shape=jax.ShapeDtypeStruct((B, C, HW), lastlayer.dtype),
        grid_spec=pltpu.PrefetchScalarGridSpec(
            num_scalar_prefetch=0,
            grid=grid,
            in_specs=in_specs,
            out_specs=pl.BlockSpec((bt, C, HW), lambda b: (b, 0, 0)),
        ),
        compiler_params=pltpu.CompilerParams(
            dimension_semantics=("parallel",),
            vmem_limit_bytes=int(vmem_budget),
        ),
    )(*operands)

    return out.reshape(B, C, H, W)


# ----------------------------------------------------------------------------
# Pure-JAX reference (for sanity checking)
# ----------------------------------------------------------------------------
def attention_layer_ref(lastlayer, nextlayer, conv_weight):
    B, C, H, W = lastlayer.shape
    m = jnp.mean(lastlayer, axis=(2, 3))                 # (B, C)
    mp = jnp.pad(m, ((0, 0), (1, 1)))
    w = conv_weight.reshape(-1)
    y = w[0] * mp[:, 0:C] + w[1] * mp[:, 1:C + 1] + w[2] * mp[:, 2:C + 2]
    gate = jax.nn.sigmoid(y)[:, :, None, None]
    return nextlayer * gate


if __name__ == "__main__":
    key = jax.random.PRNGKey(0)
    k1, k2, k3, k4 = jax.random.split(key, 4)

    # Conv1d(1, 1, 3, bias=False) weight: torch shape (1, 1, 3) -> (3,) here.
    bound = 1.0 / math.sqrt(3.0)
    conv_weight = jax.random.uniform(
        k3, (3,), minval=-bound, maxval=bound, dtype=jnp.float32)

    # --- Case 1: distinct lastlayer / nextlayer (two-stream path, 2 grid steps)
    B, C, H, W = 4, 8, 16, 16
    lastlayer = jax.random.normal(k1, (B, C, H, W), dtype=jnp.float32)
    nextlayer = jax.random.normal(k2, (B, C, H, W), dtype=jnp.float32)

    fn = jax.jit(attention_layer_pallas)
    out = jax.block_until_ready(fn(lastlayer, nextlayer, conv_weight))
    ref = attention_layer_ref(lastlayer, nextlayer, conv_weight)
    assert jnp.allclose(out, ref, atol=1e-5, rtol=1e-5), "pair path mismatch"

    # --- Case 2: shared input (classic ECA), single streamed tensor
    fn_shared = jax.jit(functools.partial(attention_layer_pallas,
                                          shared_input=True))
    out_s = jax.block_until_ready(fn_shared(lastlayer, lastlayer, conv_weight))
    ref_s = attention_layer_ref(lastlayer, lastlayer, conv_weight)
    assert jnp.allclose(out_s, ref_s, atol=1e-5, rtol=1e-5), "shared path mismatch"

    # --- Case 3: ragged batch (B not divisible by bt) + HW < 128 (masked tiles)
    B2, C2, H2, W2 = 3, 8, 8, 8
    last2 = jax.random.normal(k4, (B2, C2, H2, W2), dtype=jnp.float32)
    next2 = jax.random.normal(k2, (B2, C2, H2, W2), dtype=jnp.float32)
    out2 = jax.block_until_ready(fn(last2, next2, conv_weight))
    ref2 = attention_layer_ref(last2, next2, conv_weight)
    assert jnp.allclose(out2, ref2, atol=1e-5, rtol=1e-5), "ragged path mismatch"

    print("KERNEL_OK")
</pallas_src>

<mosaic_0001>
module attributes {stable_mosaic.version = 11 : i64} {
  func.func @_eca_kernel_pair(%arg0: i32, %arg1: memref<2x8x256xf32, #tpu.memory_space<vmem>>, %arg2: memref<2x8x256xf32, #tpu.memory_space<vmem>>, %arg3: memref<8x8xf32, #tpu.memory_space<vmem>>, %arg4: memref<2x8x256xf32, #tpu.memory_space<vmem>>) attributes {dimension_semantics = [#tpu.dimension_semantics<parallel>], iteration_bounds = array<i64: 2>, scalar_prefetch = 0 : i64, scratch_operands = 0 : i64, tpu.core_type = #tpu.core_type<tc>, window_params = [{transform_indices = @transform_0, window_bounds = array<i64: 2, 8, 256>}, {transform_indices = @transform_1, window_bounds = array<i64: 2, 8, 256>}, {pipeline_mode = #tpu.pipeline_mode<synchronous>, transform_indices = @transform_2, window_bounds = array<i64: 8, 8>}, {transform_indices = @transform_3, window_bounds = array<i64: 2, 8, 256>}]} {
    %c0 = arith.constant 0 : index
    %c0_0 = arith.constant 0 : index
    %c0_1 = arith.constant 0 : index
    %0 = vector.load %arg1[%c0, %c0_0, %c0_1] : memref<2x8x256xf32, #tpu.memory_space<vmem>>, vector<2x8x256xf32>
    %cst = arith.constant dense<0.000000e+00> : vector<2x8xf32>
    %1 = vector.multi_reduction <add>, %0, %cst [2] : vector<2x8x256xf32> to vector<2x8xf32>
    %c0_2 = arith.constant 0 : index
    %c0_3 = arith.constant 0 : index
    %2 = vector.load %arg3[%c0_2, %c0_3] : memref<8x8xf32, #tpu.memory_space<vmem>>, vector<8x8xf32>
    %cst_4 = arith.constant dense<0.000000e+00> : vector<2x8xf32>
    %3 = tpu.matmul %1, %2, %cst_4 {dimension_numbers = #tpu.dot_dimension_numbers<[1], [0], [0], [1], [0, 0, 1, 1], [], []>} : vector<2x8xf32>, vector<8x8xf32>, vector<2x8xf32> -> vector<2x8xf32>
    %4 = arith.negf %3 : vector<2x8xf32>
    %5 = math.exp %4 : vector<2x8xf32>
    %cst_5 = arith.constant 1.000000e+00 : f32
    %6 = vector.broadcast %cst_5 : f32 to vector<2x8xf32>
    %7 = arith.addf %6, %5 : vector<2x8xf32>
    %8 = arith.divf %6, %7 : vector<2x8xf32>
    %c0_6 = arith.constant 0 : index
    %c0_7 = arith.constant 0 : index
    %c0_8 = arith.constant 0 : index
    %9 = vector.load %arg2[%c0_6, %c0_7, %c0_8] : memref<2x8x256xf32, #tpu.memory_space<vmem>>, vector<2x8x256xf32>
    %10 = vector.shape_cast %8 : vector<2x8xf32> to vector<2x8x1xf32>
    %11 = vector.broadcast %10 : vector<2x8x1xf32> to vector<2x8x256xf32>
    %12 = arith.mulf %9, %11 : vector<2x8x256xf32>
    %c0_9 = arith.constant 0 : index
    %c0_10 = arith.constant 0 : index
    %c0_11 = arith.constant 0 : index
    %13 = vector.load %arg4[%c0_9, %c0_10, %c0_11] : memref<2x8x256xf32, #tpu.memory_space<vmem>>, vector<2x8x256xf32>
    tpu.vector_store %arg4[%c0_9, %c0_10, %c0_11], %12 {strides = array<i32>} : memref<2x8x256xf32, #tpu.memory_space<vmem>>, vector<2x8x256xf32>,
    return
  }
  func.func @transform_0(%arg0: i32) -> (i32, i32, i32) {
    %c0_i32 = arith.constant 0 : i32
    %c0_i32_0 = arith.constant 0 : i32
    %c0_i32_1 = arith.constant 0 : i32
    return %arg0, %c0_i32, %c0_i32_0 : i32, i32, i32
  }
  func.func @transform_1(%arg0: i32) -> (i32, i32, i32) {
    %c0_i32 = arith.constant 0 : i32
    %c0_i32_0 = arith.constant 0 : i32
    %c0_i32_1 = arith.constant 0 : i32
    return %arg0, %c0_i32, %c0_i32_0 : i32, i32, i32
  }
  func.func @transform_2(%arg0: i32) -> (i32, i32) {
    %c0_i32 = arith.constant 0 : i32
    %c0_i32_0 = arith.constant 0 : i32
    %c0_i32_1 = arith.constant 0 : i32
    return %c0_i32, %c0_i32_0 : i32, i32
  }
  func.func @transform_3(%arg0: i32) -> (i32, i32, i32) {
    %c0_i32 = arith.constant 0 : i32
    %c0_i32_0 = arith.constant 0 : i32
    %c0_i32_1 = arith.constant 0 : i32
    return %arg0, %c0_i32, %c0_i32_0 : i32, i32, i32
  }
}

</mosaic_0001>

<llo_original>
// kernel: attention_layer_pallas.1
$region0: #{attention_layer_pallas.1}
  #allocation0 [shape = 'u32[]', space=smem, size = 0x4, offset = 0x4, fixed_abs, tag = 'smem constant byte address 0x4 - core index']
  #allocation1 [shape = 'u32[144,128]{1,0:T(1,128)}', space=vmem, size = 0x12000, scoped, tag = 'internal scratch']
  %s0 = inlined_call_operand.vmem [shape: f32[4,8,256], index: 0, kind: input, shape index: {}]
  %s1 = inlined_call_operand.vmem [shape: f32[4,8,256], index: 1, kind: input, shape index: {}]
  %s2 = inlined_call_operand.vmem [shape: f32[8,8], index: 2, kind: input, shape index: {}]
  %s3 = inlined_call_operand.vmem [shape: f32[4,8,256], index: 3, kind: output, shape index: {}]
  %s4 = sld [smem:[#allocation0]]
  $region45: #{attention_layer_pallas.1} parent=0
    _
  %s6 = ssub.s32 1, %s4
  %s7 = scalar_select 0, %s6, %s4
  loop: start=0, step=1, limit=4
  $region2: #{attention_layer_pallas.1} parent=0 // loop_pre_header
    _
  $region3: #{attention_layer_pallas.1} parent=0 // loop_header
    %s9 = sphi 0, %s13
    %p10 = scmp.ge.s32.totalorder %s9, 4
    %s19 = sphi 0, %s21
    %s22 = sphi 0, %s19
    %s23 = sphi 0, %s22
    %s39 = sphi 0, %s23
    %s45 = sphi 0, %s47
    %s48 = sphi 0, %s45
    %s49 = sphi 0, %s48
    %s65 = sphi 0, %s49
    %s69 = sphi 0, %s69
    %s71 = sphi 0, %s69
    %s72 = sphi 0, %s71
    %s86 = sphi 0, %s72
    %s92 = sphi 0, %s94
    %s95 = sphi 0, %s92
    %s96 = sphi 0, %s95
    %s112 = sphi 0, %s96
  $region4: #{attention_layer_pallas.1} parent=0 // loop_header_branch
    %12 = sbr.rel (%p10) target = $region8
  $region5: #{attention_layer_pallas.1} parent=0 // loop_body
    %s14 = ssub.s32 %s9, 1
    %s15 = ssub.s32 %s9, 2
    %s16 = sadd.s32 %s9, 1
    %s17 = ssub.s32 %s9, %s16
    %p18 = scmp.eq.s32.totalorder %s17, 0
    %s20 = sadd.s32 %s19, 1
    %s21 = scalar_select %p18, %s19, %s20
    %p24 = pneg %p18
    %p25 = scmp.eq.s32.totalorder %s9, 1
    %p26 = por %p24, %p25
    %p27 = scmp.ne.s32.totalorder %s19, %s22
    %p28 = scmp.eq.s32.totalorder %s9, 0
    %p29 = por %p27, %p28
    %p30 = scmp.ne.s32.totalorder %s19, %s22
    %p31 = scmp.eq.s32.totalorder %s14, 1
    %p32 = por %p30, %p31
    %p33 = scmp.ne.s32.totalorder %s22, %s23
    %p34 = scmp.eq.s32.totalorder %s14, 0
    %p35 = por %p33, %p34
    %p36 = scmp.ne.s32.totalorder %s22, %s23
    %p37 = scmp.eq.s32.totalorder %s15, 1
    %p38 = por %p36, %p37
    %p40 = scmp.ne.s32.totalorder %s23, %s39
    %p41 = scmp.eq.s32.totalorder %s15, 0
    %p42 = por %p40, %p41
    %s43 = ssub.s32 %s9, %s16
    %p44 = scmp.eq.s32.totalorder %s43, 0
    %s46 = sadd.s32 %s45, 1
    %s47 = scalar_select %p44, %s45, %s46
    %p50 = pneg %p44
    %p51 = scmp.eq.s32.totalorder %s9, 1
    %p52 = por %p50, %p51
    %p53 = scmp.ne.s32.totalorder %s45, %s48
    %p54 = scmp.eq.s32.totalorder %s9, 0
    %p55 = por %p53, %p54
    %p56 = scmp.ne.s32.totalorder %s45, %s48
    %p57 = scmp.eq.s32.totalorder %s14, 1
    %p58 = por %p56, %p57
    %p59 = scmp.ne.s32.totalorder %s48, %s49
    %p60 = scmp.eq.s32.totalorder %s14, 0
    %p61 = por %p59, %p60
    %p62 = scmp.ne.s32.totalorder %s48, %s49
    %p63 = scmp.eq.s32.totalorder %s15, 1
    %p64 = por %p62, %p63
    %p66 = scmp.ne.s32.totalorder %s49, %s65
    %p67 = scmp.eq.s32.totalorder %s15, 0
    %p68 = por %p66, %p67
    %s70 = sadd.s32 %s69, 1
    %p73 = scmp.eq.s32.totalorder %s9, 1
    %p74 = scmp.ne.s32.totalorder %s69, %s71
    %p75 = scmp.eq.s32.totalorder %s9, 0
    %p76 = por %p74, %p75
    %p77 = scmp.ne.s32.totalorder %s69, %s71
    %p78 = scmp.eq.s32.totalorder %s14, 1
    %p79 = por %p77, %p78
    %p80 = scmp.ne.s32.totalorder %s71, %s72
    %p81 = scmp.eq.s32.totalorder %s14, 0
    %p82 = por %p80, %p81
    %p83 = scmp.ne.s32.totalorder %s71, %s72
    %p84 = scmp.eq.s32.totalorder %s15, 1
    %p85 = por %p83, %p84
    %p87 = scmp.ne.s32.totalorder %s72, %s86
    %p88 = scmp.eq.s32.totalorder %s15, 0
    %p89 = por %p87, %p88
    %s90 = ssub.s32 %s9, %s16
    %p91 = scmp.eq.s32.totalorder %s90, 0
    %s93 = sadd.s32 %s92, 1
    %s94 = scalar_select %p91, %s92, %s93
    %p97 = pneg %p91
    %p98 = scmp.eq.s32.totalorder %s9, 1
    %p99 = por %p97, %p98
    %p100 = scmp.ne.s32.totalorder %s92, %s95
    %p101 = scmp.eq.s32.totalorder %s9, 0
    %p102 = por %p100, %p101
    %p103 = scmp.ne.s32.totalorder %s92, %s95
    %p104 = scmp.eq.s32.totalorder %s14, 1
    %p105 = por %p103, %p104
    %p106 = scmp.ne.s32.totalorder %s95, %s96
    %p107 = scmp.eq.s32.totalorder %s14, 0
    %p108 = por %p106, %p107
    %p109 = scmp.ne.s32.totalorder %s95, %s96
    %p110 = scmp.eq.s32.totalorder %s15, 1
    %p111 = por %p109, %p110
    %p113 = scmp.ne.s32.totalorder %s96, %s112
    %p114 = scmp.eq.s32.totalorder %s15, 0
    %p115 = por %p113, %p114
    %p116 = scmp.le.s32.totalorder 1, %s9
    %p117 = scmp.lt.s32.totalorder %s9, 3
    %p118 = pnand %p116, %p117
    %p119 = pneg %p118
    // Predicated region
    $region9: #{attention_layer_pallas.1} parent=5 // pred_check
      _
    $region10: #{attention_layer_pallas.1} parent=5 // pred_check_branch
      %121 = sbr.rel (%p118) target = $region12
    $region11: #{attention_layer_pallas.1} parent=5 // pred_region
      %s122 = ssub.s32 %s9, 1
      // Predicated region
      $region13: #{attention_layer_pallas.1} parent=11 // pred_check
        %p123 = pneg %p82
      $region14: #{attention_layer_pallas.1} parent=11 // pred_check_branch
        %125 = sbr.rel (%p123) target = $region16
      $region15: #{attention_layer_pallas.1} parent=11 // pred_region
        _
      $region16: #{attention_layer_pallas.1} parent=11 // pred_fallthru
        _
    $region12: #{attention_layer_pallas.1} parent=5 // pred_fallthru
      _
    %p126 = scmp.lt.s32.totalorder %s9, 2
    // Predicated region
    $region17: #{attention_layer_pallas.1} parent=5 // pred_check
      %p127 = pneg %p126
    $region18: #{attention_layer_pallas.1} parent=5 // pred_check_branch
      %129 = sbr.rel (%p127) target = $region20
    $region19: #{attention_layer_pallas.1} parent=5 // pred_region
      // Predicated region
      $region21: #{attention_layer_pallas.1} parent=19 // pred_check
        %p130 = pneg %p29
      $region22: #{attention_layer_pallas.1} parent=19 // pred_check_branch
        %132 = sbr.rel (%p130) target = $region24
      $region23: #{attention_layer_pallas.1} parent=19 // pred_region
        %s133 = smul.u32 2, %s9
        %p134 = scmp.lt.s32.totalorder %s133, 3
        %s135 = scalar_select %p134, %s133, 3
        %s136 = smul.addr %s135, 2
        %s137 = smul.addr %s136, 8
        %s138 = scalar_lea.vmem %s0, %s137
        %s139 = smul.u32 2, %s9
      $region24: #{attention_layer_pallas.1} parent=19 // pred_fallthru
        _
      // Predicated region
      $region25: #{attention_layer_pallas.1} parent=19 // pred_check
        %p140 = pneg %p55
      $region26: #{attention_layer_pallas.1} parent=19 // pred_check_branch
        %142 = sbr.rel (%p140) target = $region28
      $region27: #{attention_layer_pallas.1} parent=19 // pred_region
        %s143 = smul.u32 2, %s9
        %p144 = scmp.lt.s32.totalorder %s143, 3
        %s145 = scalar_select %p144, %s143, 3
        %s146 = smul.addr %s145, 2
        %s147 = smul.addr %s146, 8
        %s148 = scalar_lea.vmem %s1, %s147
        %s149 = smul.u32 2, %s9
      $region28: #{attention_layer_pallas.1} parent=19 // pred_fallthru
        _
    $region20: #{attention_layer_pallas.1} parent=5 // pred_fallthru
      _
    %p150 = scmp.le.s32.totalorder 1, %s9
    %p151 = scmp.lt.s32.totalorder %s9, 3
    %p152 = pnand %p150, %p151
    %p153 = pneg %p152
    // Predicated region
    $region29: #{attention_layer_pallas.1} parent=5 // pred_check
      _
    $region30: #{attention_layer_pallas.1} parent=5 // pred_check_branch
      %155 = sbr.rel (%p152) target = $region32
    $region31: #{attention_layer_pallas.1} parent=5 // pred_region
      %s156 = ssub.s32 %s9, 1
      %s157 = smul.u32 2, %s14
      %p158 = scmp.lt.s32.totalorder %s157, 3
      %s159 = scalar_select %p158, %s157, 3
      %s160 = smul.addr %s159, 2
      %s161 = smul.addr %s160, 8
      %s162 = scalar_lea.vmem %s0, %s161
      %p163 = pneg %p35
      %p164 = pneg %p32
      %s165 = smul.u32 2, %s14
      %p166 = scmp.lt.s32.totalorder %s165, 3
      %s167 = scalar_select %p166, %s165, 3
      %s168 = smul.addr %s167, 2
      %s169 = smul.addr %s168, 8
      %s170 = scalar_lea.vmem %s1, %s169
      %p171 = pneg %p61
      %p172 = pneg %p58
      %p173 = pneg %p82
      %p174 = pneg %p79
      %p175 = pneg %p108
      %p176 = pneg %p105
      %s177 = smul.u32 2, %s14
      %p178 = scmp.lt.s32.totalorder %s177, 3
      %s179 = scalar_select %p178, %s177, 3
      %s180 = smul.addr %s179, 2
      %s181 = smul.addr %s180, 8
      %s182 = scalar_lea.vmem %s3, %s181
      %s183 = smul.u32 2, %s14
      %p184 = scmp.lt.s32.totalorder %s183, 3
      %s185 = scalar_select %p184, %s183, 3
      %s186 = smul.addr %s185, 2
      %s187 = smul.addr %s186, 8
      %s188 = scalar_lea.vmem %s0, %s187
      %s189 = smul.u32 2, %s14
      %s190 = smul.u32 2, %s14
      %p191 = scmp.lt.s32.totalorder %s190, 3
      %s192 = scalar_select %p191, %s190, 3
      %s193 = smul.addr %s192, 2
      %s194 = smul.addr %s193, 8
      %s195 = scalar_lea.vmem %s1, %s194
      %s196 = smul.u32 2, %s14
      %s197 = smul.u32 2, %s14
      %p198 = scmp.lt.s32.totalorder %s197, 3
      %s199 = scalar_select %p198, %s197, 3
      %s200 = smul.addr %s199, 2
      %s201 = smul.addr %s200, 8
      %s202 = scalar_lea.vmem %s3, %s201
      %s203 = smul.u32 2, %s14
      %v204 = vld [vmem:[%s188] sm:$0xff]
      %v205 = vld [vmem:[%s188 + $0x8] sm:$0xff]
      %v206 = vld [vmem:[%s188 + $0x10] sm:$0xff]
      %v207 = vld [vmem:[%s188 + $0x18] sm:$0xff]
      %v208 = vadd.f32 %v204, %v205
      %209 = vadd.xlane.f32.xlu0 %v208
      %v210 = vpop.xlane.xlu0 %209
      %v211 = vadd.f32 %v206, %v207
      %212 = vadd.xlane.f32.xlu0 %v211
      %v213 = vpop.xlane.xlu0 %212
      %v214 = vld [vmem:[%s2] sm:$0xff]
      %v217 = vlaneseq
      %v218 = vand.u32 %v217, 127
      %v219 = vlaneseq
      %v220 = vshrl.u32 %v219, 7
      %v221 = vsub.s32 %v218, %v220
      %v222 = vrot.slane %v210, %v221
      %v223 = vlaneseq
      %v224 = vshrl.u32 %v223, 7
      %v225 = vsub.s32 %v218, %v224
      %v226 = vrot.slane %v213, %v225
      %vm227 = vcmask 1041409
      %v228 = vsel %vm227, %v226, %v222
      %vm229 = vcmask 64512
      %v230 = vsel %vm229, %v228, 0
      %232 = vmatprep.subr.mxu0 0.0
      %233 = vmatpush1.msra.mxu0 %v214
      %234 = vmatprep.subr.mxu0 0.0
      %235 = vmatpush1.msra.mxu0 0.0
      %236 = vmatprep.subr.mxu0 0.0
      %237 = vmatpush1.msra.mxu0 0.0
      %238 = vmatprep.subr.mxu0 0.0
      %239 = vmatpush1.msra.mxu0 0.0
      %240 = vmatprep.subr.mxu0 0.0
      %241 = vmatpush1.msra.mxu0 0.0
      %242 = vmatprep.subr.mxu0 0.0
      %243 = vmatpush1.msra.mxu0 0.0
      %244 = vmatprep.subr.mxu0 0.0
      %245 = vmatpush1.msra.mxu0 0.0
      %246 = vmatprep.subr.mxu0 0.0
      %247 = vmatpush1.msra.mxu0 0.0
      %248 = vmatprep.subr.mxu0 0.0
      %249 = vmatpush1.msra.mxu0 0.0
      %250 = vmatprep.subr.mxu0 0.0
      %251 = vmatpush1.msra.mxu0 0.0
      %252 = vmatprep.subr.mxu0 0.0
      %253 = vmatpush1.msra.mxu0 0.0
      %254 = vmatprep.subr.mxu0 0.0
      %255 = vmatpush1.msra.mxu0 0.0
      %256 = vmatprep.subr.mxu0 0.0
      %257 = vmatpush1.msra.mxu0 0.0
      %258 = vmatprep.subr.mxu0 0.0
      %259 = vmatpush1.msra.mxu0 0.0
      %260 = vmatprep.subr.mxu0 0.0
      %261 = vmatpush1.msra.mxu0 0.0
      %262 = vmatprep.subr.mxu0 0.0
      %263 = vmatpush1.msra.mxu0 0.0
      %264 = vmatprep.subr.mxu0 0.0
      %265 = vmatpush1.msra.mxu0 0.0
      %266 = vmatprep.subr.mxu0 0.0
      %267 = vmatpush1.msra.mxu0 0.0
      %268 = vmatprep.subr.mxu0 0.0
      %269 = vmatpush1.msra.mxu0 0.0
      %270 = vmatprep.subr.mxu0 0.0
      %271 = vmatpush1.msra.mxu0 0.0
      %272 = vmatprep.subr.mxu0 0.0
      %273 = vmatpush1.msra.mxu0 0.0
      %274 = vmatprep.subr.mxu0 0.0
      %275 = vmatpush1.msra.mxu0 0.0
      %276 = vmatprep.subr.mxu0 0.0
      %277 = vmatpush1.msra.mxu0 0.0
      %278 = vmatprep.subr.mxu0 0.0
      %279 = vmatpush1.msra.mxu0 0.0
      %280 = vmatprep.subr.mxu0 0.0
      %281 = vmatpush1.msra.mxu0 0.0
      %282 = vmatprep.subr.mxu0 0.0
      %283 = vmatpush1.msra.mxu0 0.0
      %284 = vmatprep.subr.mxu0 0.0
      %285 = vmatpush1.msra.mxu0 0.0
      %286 = vmatprep.subr.mxu0 0.0
      %287 = vmatpush1.msra.mxu0 0.0
      %288 = vmatprep.subr.mxu0 0.0
      %289 = vmatpush1.msra.mxu0 0.0
      %290 = vmatprep.subr.mxu0 0.0
      %291 = vmatpush1.msra.mxu0 0.0
      %292 = vmatprep.subr.mxu0 0.0
      %293 = vmatpush1.msra.mxu0 0.0
      %294 = vmatprep.subr.mxu0 0.0
      %295 = vmatpush1.msra.mxu0 0.0
      %296 = vmatprep.mubr.f32.mxu0 0.0
      %297 = vmatmul.mubr.f32.gmra.mrb[0].mxu0 %v230
      %v298 = vpop.f32.mrb[0].mxu0
      %v299 = vadd.f32 0.0, %v298
      %v300 = vpop.f32.mrb[0].mxu0
      %301 = vdwg.mxu0
      %v302 = vxor.u32 %v299, 2147483648
      %v303 = vmul.f32 %v302, 1.442695
      %v304 = vpow.pop %v303
      %v305 = vadd.f32 %v304, 1.0
      %v306 = vrcp.pop %v305
      %v307 = vmul.f32 1.0, %v306
      %v308 = vld [vmem:[%s195] sm:$0xff]
      %v309 = vld [vmem:[%s195 + $0x8] sm:$0xff]
      %v310 = vld [vmem:[%s195 + $0x10] sm:$0xff]
      %v311 = vld [vmem:[%s195 + $0x18] sm:$0xff]
      %v312 = vlaneseq
      %v313 = vshrl.u32 %v312, 7
      %v314 = vsub.s32 0, %v313
      %v315 = vrot.slane %v307, %v314
      %317 = vbcast.lane.b32.xlu0 %v315, 256
      %v318 = vpop.permute.xlu0 %317
      %v319 = vlaneseq
      %v320 = vshrl.u32 %v319, 7
      %v321 = vsub.s32 1, %v320
      %v322 = vrot.slane %v307, %v321
      %324 = vbcast.lane.b32.xlu0 %v322, 256
      %v325 = vpop.permute.xlu0 %324
      %v326 = vmul.f32 %v308, %v318
      %v327 = vmul.f32 %v309, %v318
      %v328 = vmul.f32 %v310, %v325
      %v329 = vmul.f32 %v311, %v325
      %330 = vst [vmem:[%s202] sm:$0xff] %v326
      %331 = vst [vmem:[%s202 + $0x8] sm:$0xff] %v327
      %332 = vst [vmem:[%s202 + $0x10] sm:$0xff] %v328
      %333 = vst [vmem:[%s202 + $0x18] sm:$0xff] %v329
      %s334 = smul.u32 2, %s14
      %p335 = scmp.lt.s32.totalorder %s334, 3
      %s336 = scalar_select %p335, %s334, 3
      %s337 = smul.addr %s336, 2
      %s338 = smul.addr %s337, 8
      %s339 = scalar_lea.vmem %s3, %s338
      // Predicated region
      $region33: #{attention_layer_pallas.1} parent=31 // pred_check
        %p340 = pneg %p105
      $region34: #{attention_layer_pallas.1} parent=31 // pred_check_branch
        %342 = sbr.rel (%p340) target = $region36
      $region35: #{attention_layer_pallas.1} parent=31 // pred_region
        %s343 = smul.u32 2, %s14
      $region36: #{attention_layer_pallas.1} parent=31 // pred_fallthru
        _
    $region32: #{attention_layer_pallas.1} parent=5 // pred_fallthru
      _
    %p344 = scmp.le.s32.totalorder 2, %s9
    // Predicated region
    $region37: #{attention_layer_pallas.1} parent=5 // pred_check
      %p345 = pneg %p344
    $region38: #{attention_layer_pallas.1} parent=5 // pred_check_branch
      %347 = sbr.rel (%p345) target = $region40
    $region39: #{attention_layer_pallas.1} parent=5 // pred_region
      %s348 = ssub.s32 %s9, 2
      // Predicated region
      $region41: #{attention_layer_pallas.1} parent=39 // pred_check
        %p349 = pneg %p111
      $region42: #{attention_layer_pallas.1} parent=39 // pred_check_branch
        %351 = sbr.rel (%p349) target = $region44
      $region43: #{attention_layer_pallas.1} parent=39 // pred_region
        %s352 = smul.u32 2, %s15
        %p353 = scmp.lt.s32.totalorder %s352, 3
        %s354 = scalar_select %p353, %s352, 3
        %s355 = smul.addr %s354, 2
        %s356 = smul.addr %s355, 8
        %s357 = scalar_lea.vmem %s3, %s356
      $region44: #{attention_layer_pallas.1} parent=39 // pred_fallthru
        _
    $region40: #{attention_layer_pallas.1} parent=5 // pred_fallthru
      _
  $region6: #{attention_layer_pallas.1} parent=0 // loop_footer
    %s13 = sadd.s32 1, %s9
  $region7: #{attention_layer_pallas.1} parent=0 // loop_footer_branch
    %8 = sbr.rel target = $region3
  $region8: #{attention_layer_pallas.1} parent=0 // loop_exit
    _

</llo_original>
